<compile_context>
chip_gen: v5e
topology: v5e:2x2
jax: 0.10.0
libtpu: 0.0.40
codegen_flags: <defaults>
</compile_context>

<pallas_src>
import jax
import jax.numpy as jnp
from jax.experimental import pallas as pl
from jax.experimental.pallas import tpu as pltpu


def _conv_im2col_kernel(p_ref, w_ref, b_ref, o_ref):
    """im2col direct convolution, lane-dense, single invocation.

    p_ref: VMEM (K, Ppad) f32  -- row k = flattened shifted patch for tap k
    w_ref: SMEM (O*K,)    f32  -- flattened PyTorch OIHW weight
    b_ref: SMEM (O,)      f32  -- bias
    o_ref: VMEM (O, Ppad) f32  -- row o = flattened output channel o
    """
    K, Ppad = p_ref.shape
    O, _ = o_ref.shape

    # One lane-dense accumulator per output channel, initialised with bias.
    accs = [jnp.full((1, Ppad), b_ref[o], dtype=jnp.float32) for o in range(O)]

    # k-outer / o-inner: each patch row is loaded once (full-lane vld) and
    # reused for all O output channels.  Fully unrolled broadcast-FMA.
    for k in range(K):
        row = p_ref[k:k + 1, :]                      # (1, Ppad)
        for o in range(O):
            accs[o] = accs[o] + w_ref[o * K + k] * row

    for o in range(O):
        o_ref[o:o + 1, :] = accs[o].astype(o_ref.dtype)   # lane-dense store


def conv2d_nchw(x, w, b):
    """Valid (no padding, stride 1) conv; x:(N,C,H,W), w:(O,C,KH,KW), b:(O,)."""
    N, C, H, W = x.shape
    O, Cw, KH, KW = w.shape
    assert Cw == C
    OH, OW = H - KH + 1, W - KW + 1

    K = C * KH * KW                       # number of taps        (27)
    P = N * OH * OW                       # number of output pts  (392)
    Ppad = pl.cdiv(P, 128) * 128          # lane-dense width      (512)

    # ---- wrapper-side layout plumbing (no arithmetic) ----------------------
    # im2col: row k=(c,kh,kw) holds x[n, c, oh+kh, ow+kw] for all (n,oh,ow),
    # flattened in (n, oh, ow) order; padded with zeros to Ppad lanes.
    xf = x.astype(jnp.float32)
    patches = jnp.stack([
        xf[:, c, kh:kh + OH, kw:kw + OW].reshape(P)
        for c in range(C) for kh in range(KH) for kw in range(KW)
    ], axis=0)                                            # (K, P)
    patches = jnp.pad(patches, ((0, 0), (0, Ppad - P)))   # (K, Ppad)

    w_flat = w.reshape(-1).astype(jnp.float32)            # (O*K,)
    b = b.astype(jnp.float32)                             # (O,)

    out_flat = pl.pallas_call(
        _conv_im2col_kernel,
        out_shape=jax.ShapeDtypeStruct((O, Ppad), jnp.float32),
        grid=(1,),                       # single step: everything fits VMEM
        in_specs=[
            pl.BlockSpec((K, Ppad), lambda i: (0, 0)),
            pl.BlockSpec(memory_space=pltpu.MemorySpace.SMEM),
            pl.BlockSpec(memory_space=pltpu.MemorySpace.SMEM),
        ],
        out_specs=pl.BlockSpec((O, Ppad), lambda i: (0, 0)),
    )(patches, w_flat, b)

    # Undo the im2col layout: (O, N*OH*OW) -> (N, O, OH, OW).
    out = out_flat[:, :P].reshape(O, N, OH, OW).transpose(1, 0, 2, 3)
    return out.astype(x.dtype)


def init_params(key):
    """Deterministic Conv2d(3, 3, 3) parameters (PyTorch-style uniform fan-in init)."""
    C_in, C_out, Kk = 3, 3, 3
    k1, k2, k3, k4 = jax.random.split(key, 4)
    bound = 1.0 / jnp.sqrt(C_in * Kk * Kk)
    w1 = jax.random.uniform(k1, (C_out, C_in, Kk, Kk), jnp.float32, -bound, bound)
    b1 = jax.random.uniform(k2, (C_out,), jnp.float32, -bound, bound)
    w2 = jax.random.uniform(k3, (C_out, C_in, Kk, Kk), jnp.float32, -bound, bound)
    b2 = jax.random.uniform(k4, (C_out,), jnp.float32, -bound, bound)
    return (w1, b1), (w2, b2)


def model_forward(x, params):
    (w1, b1), (w2, b2) = params
    s = conv2d_nchw(x, w1, b1)        # hot path, Pallas kernel
    # TODO(synk): conv2 / BatchNorm3d outputs are discarded by the reference
    # forward (it returns `s`); BatchNorm3d on a 4-D tensor is also invalid in
    # PyTorch, so the dead branch is not reproduced here.
    del w2, b2
    return s


if __name__ == "__main__":
    key = jax.random.PRNGKey(0)
    kx, kp = jax.random.split(key)

    # Small NCHW input consistent with Conv2d(3, 3, 3): batch=2, channels=3, 16x16.
    x = jax.random.normal(kx, (2, 3, 16, 16), dtype=jnp.float32)
    params = init_params(kp)

    out = model_forward(x, params)
    out = jax.block_until_ready(out)

    # Sanity check against XLA's conv (reference semantics of nn.Conv2d).
    (w1, b1), _ = params
    ref = jax.lax.conv_general_dilated(
        x, w1, window_strides=(1, 1), padding="VALID",
        dimension_numbers=("NCHW", "OIHW", "NCHW")) + b1[None, :, None, None]
    assert out.shape == (2, 3, 14, 14)
    assert jnp.allclose(out, ref, atol=1e-5, rtol=1e-5)

    print("KERNEL_OK")
</pallas_src>

<mosaic_0001>
module attributes {stable_mosaic.version = 11 : i64} {
  func.func @_conv_im2col_kernel(%arg0: i32, %arg1: memref<27x512xf32, #tpu.memory_space<vmem>>, %arg2: memref<81xf32, #tpu.memory_space<smem>>, %arg3: memref<3xf32, #tpu.memory_space<smem>>, %arg4: memref<3x512xf32, #tpu.memory_space<vmem>>) attributes {dimension_semantics = [#tpu.dimension_semantics<arbitrary>], iteration_bounds = array<i64: 1>, scalar_prefetch = 0 : i64, scratch_operands = 0 : i64, tpu.core_type = #tpu.core_type<tc>, window_params = [{pipeline_mode = #tpu.pipeline_mode<synchronous>, transform_indices = @transform_0, window_bounds = array<i64: 27, 512>}, {transform_indices = @transform_1, window_bounds = array<i64: 81>}, {transform_indices = @transform_2, window_bounds = array<i64: 3>}, {pipeline_mode = #tpu.pipeline_mode<synchronous>, transform_indices = @transform_3, window_bounds = array<i64: 3, 512>}]} {
    %c0 = arith.constant 0 : index
    %0 = memref.load %arg3[%c0] : memref<3xf32, #tpu.memory_space<smem>>
    %1 = vector.broadcast %0 : f32 to vector<1x512xf32>
    %c1 = arith.constant 1 : index
    %2 = memref.load %arg3[%c1] : memref<3xf32, #tpu.memory_space<smem>>
    %3 = vector.broadcast %2 : f32 to vector<1x512xf32>
    %c2 = arith.constant 2 : index
    %4 = memref.load %arg3[%c2] : memref<3xf32, #tpu.memory_space<smem>>
    %5 = vector.broadcast %4 : f32 to vector<1x512xf32>
    %c0_0 = arith.constant 0 : index
    %c0_1 = arith.constant 0 : index
    %6 = vector.load %arg1[%c0_0, %c0_1] : memref<27x512xf32, #tpu.memory_space<vmem>>, vector<1x512xf32>
    %c0_2 = arith.constant 0 : index
    %7 = memref.load %arg2[%c0_2] : memref<81xf32, #tpu.memory_space<smem>>
    %8 = vector.broadcast %7 : f32 to vector<1x512xf32>
    %9 = arith.mulf %8, %6 : vector<1x512xf32>
    %10 = arith.addf %1, %9 : vector<1x512xf32>
    %c27 = arith.constant 27 : index
    %11 = memref.load %arg2[%c27] : memref<81xf32, #tpu.memory_space<smem>>
    %12 = vector.broadcast %11 : f32 to vector<1x512xf32>
    %13 = arith.mulf %12, %6 : vector<1x512xf32>
    %14 = arith.addf %3, %13 : vector<1x512xf32>
    %c54 = arith.constant 54 : index
    %15 = memref.load %arg2[%c54] : memref<81xf32, #tpu.memory_space<smem>>
    %16 = vector.broadcast %15 : f32 to vector<1x512xf32>
    %17 = arith.mulf %16, %6 : vector<1x512xf32>
    %18 = arith.addf %5, %17 : vector<1x512xf32>
    %c1_3 = arith.constant 1 : index
    %c0_4 = arith.constant 0 : index
    %19 = vector.load %arg1[%c1_3, %c0_4] : memref<27x512xf32, #tpu.memory_space<vmem>>, vector<1x512xf32>
    %c1_5 = arith.constant 1 : index
    %20 = memref.load %arg2[%c1_5] : memref<81xf32, #tpu.memory_space<smem>>
    %21 = vector.broadcast %20 : f32 to vector<1x512xf32>
    %22 = arith.mulf %21, %19 : vector<1x512xf32>
    %23 = arith.addf %10, %22 : vector<1x512xf32>
    %c28 = arith.constant 28 : index
    %24 = memref.load %arg2[%c28] : memref<81xf32, #tpu.memory_space<smem>>
    %25 = vector.broadcast %24 : f32 to vector<1x512xf32>
    %26 = arith.mulf %25, %19 : vector<1x512xf32>
    %27 = arith.addf %14, %26 : vector<1x512xf32>
    %c55 = arith.constant 55 : index
    %28 = memref.load %arg2[%c55] : memref<81xf32, #tpu.memory_space<smem>>
    %29 = vector.broadcast %28 : f32 to vector<1x512xf32>
    %30 = arith.mulf %29, %19 : vector<1x512xf32>
    %31 = arith.addf %18, %30 : vector<1x512xf32>
    %c2_6 = arith.constant 2 : index
    %c0_7 = arith.constant 0 : index
    %32 = vector.load %arg1[%c2_6, %c0_7] : memref<27x512xf32, #tpu.memory_space<vmem>>, vector<1x512xf32>
    %c2_8 = arith.constant 2 : index
    %33 = memref.load %arg2[%c2_8] : memref<81xf32, #tpu.memory_space<smem>>
    %34 = vector.broadcast %33 : f32 to vector<1x512xf32>
    %35 = arith.mulf %34, %32 : vector<1x512xf32>
    %36 = arith.addf %23, %35 : vector<1x512xf32>
    %c29 = arith.constant 29 : index
    %37 = memref.load %arg2[%c29] : memref<81xf32, #tpu.memory_space<smem>>
    %38 = vector.broadcast %37 : f32 to vector<1x512xf32>
    %39 = arith.mulf %38, %32 : vector<1x512xf32>
    %40 = arith.addf %27, %39 : vector<1x512xf32>
    %c56 = arith.constant 56 : index
    %41 = memref.load %arg2[%c56] : memref<81xf32, #tpu.memory_space<smem>>
    %42 = vector.broadcast %41 : f32 to vector<1x512xf32>
    %43 = arith.mulf %42, %32 : vector<1x512xf32>
    %44 = arith.addf %31, %43 : vector<1x512xf32>
    %c3 = arith.constant 3 : index
    %c0_9 = arith.constant 0 : index
    %45 = vector.load %arg1[%c3, %c0_9] : memref<27x512xf32, #tpu.memory_space<vmem>>, vector<1x512xf32>
    %c3_10 = arith.constant 3 : index
    %46 = memref.load %arg2[%c3_10] : memref<81xf32, #tpu.memory_space<smem>>
    %47 = vector.broadcast %46 : f32 to vector<1x512xf32>
    %48 = arith.mulf %47, %45 : vector<1x512xf32>
    %49 = arith.addf %36, %48 : vector<1x512xf32>
    %c30 = arith.constant 30 : index
    %50 = memref.load %arg2[%c30] : memref<81xf32, #tpu.memory_space<smem>>
    %51 = vector.broadcast %50 : f32 to vector<1x512xf32>
    %52 = arith.mulf %51, %45 : vector<1x512xf32>
    %53 = arith.addf %40, %52 : vector<1x512xf32>
    %c57 = arith.constant 57 : index
    %54 = memref.load %arg2[%c57] : memref<81xf32, #tpu.memory_space<smem>>
    %55 = vector.broadcast %54 : f32 to vector<1x512xf32>
    %56 = arith.mulf %55, %45 : vector<1x512xf32>
    %57 = arith.addf %44, %56 : vector<1x512xf32>
    %c4 = arith.constant 4 : index
    %c0_11 = arith.constant 0 : index
    %58 = vector.load %arg1[%c4, %c0_11] : memref<27x512xf32, #tpu.memory_space<vmem>>, vector<1x512xf32>
    %c4_12 = arith.constant 4 : index
    %59 = memref.load %arg2[%c4_12] : memref<81xf32, #tpu.memory_space<smem>>
    %60 = vector.broadcast %59 : f32 to vector<1x512xf32>
    %61 = arith.mulf %60, %58 : vector<1x512xf32>
    %62 = arith.addf %49, %61 : vector<1x512xf32>
    %c31 = arith.constant 31 : index
    %63 = memref.load %arg2[%c31] : memref<81xf32, #tpu.memory_space<smem>>
    %64 = vector.broadcast %63 : f32 to vector<1x512xf32>
    %65 = arith.mulf %64, %58 : vector<1x512xf32>
    %66 = arith.addf %53, %65 : vector<1x512xf32>
    %c58 = arith.constant 58 : index
    %67 = memref.load %arg2[%c58] : memref<81xf32, #tpu.memory_space<smem>>
    %68 = vector.broadcast %67 : f32 to vector<1x512xf32>
    %69 = arith.mulf %68, %58 : vector<1x512xf32>
    %70 = arith.addf %57, %69 : vector<1x512xf32>
    %c5 = arith.constant 5 : index
    %c0_13 = arith.constant 0 : index
    %71 = vector.load %arg1[%c5, %c0_13] : memref<27x512xf32, #tpu.memory_space<vmem>>, vector<1x512xf32>
    %c5_14 = arith.constant 5 : index
    %72 = memref.load %arg2[%c5_14] : memref<81xf32, #tpu.memory_space<smem>>
    %73 = vector.broadcast %72 : f32 to vector<1x512xf32>
    %74 = arith.mulf %73, %71 : vector<1x512xf32>
    %75 = arith.addf %62, %74 : vector<1x512xf32>
    %c32 = arith.constant 32 : index
    %76 = memref.load %arg2[%c32] : memref<81xf32, #tpu.memory_space<smem>>
    %77 = vector.broadcast %76 : f32 to vector<1x512xf32>
    %78 = arith.mulf %77, %71 : vector<1x512xf32>
    %79 = arith.addf %66, %78 : vector<1x512xf32>
    %c59 = arith.constant 59 : index
    %80 = memref.load %arg2[%c59] : memref<81xf32, #tpu.memory_space<smem>>
    %81 = vector.broadcast %80 : f32 to vector<1x512xf32>
    %82 = arith.mulf %81, %71 : vector<1x512xf32>
    %83 = arith.addf %70, %82 : vector<1x512xf32>
    %c6 = arith.constant 6 : index
    %c0_15 = arith.constant 0 : index
    %84 = vector.load %arg1[%c6, %c0_15] : memref<27x512xf32, #tpu.memory_space<vmem>>, vector<1x512xf32>
    %c6_16 = arith.constant 6 : index
    %85 = memref.load %arg2[%c6_16] : memref<81xf32, #tpu.memory_space<smem>>
    %86 = vector.broadcast %85 : f32 to vector<1x512xf32>
    %87 = arith.mulf %86, %84 : vector<1x512xf32>
    %88 = arith.addf %75, %87 : vector<1x512xf32>
    %c33 = arith.constant 33 : index
    %89 = memref.load %arg2[%c33] : memref<81xf32, #tpu.memory_space<smem>>
    %90 = vector.broadcast %89 : f32 to vector<1x512xf32>
    %91 = arith.mulf %90, %84 : vector<1x512xf32>
    %92 = arith.addf %79, %91 : vector<1x512xf32>
    %c60 = arith.constant 60 : index
    %93 = memref.load %arg2[%c60] : memref<81xf32, #tpu.memory_space<smem>>
    %94 = vector.broadcast %93 : f32 to vector<1x512xf32>
    %95 = arith.mulf %94, %84 : vector<1x512xf32>
    %96 = arith.addf %83, %95 : vector<1x512xf32>
    %c7 = arith.constant 7 : index
    %c0_17 = arith.constant 0 : index
    %97 = vector.load %arg1[%c7, %c0_17] : memref<27x512xf32, #tpu.memory_space<vmem>>, vector<1x512xf32>
    %c7_18 = arith.constant 7 : index
    %98 = memref.load %arg2[%c7_18] : memref<81xf32, #tpu.memory_space<smem>>
    %99 = vector.broadcast %98 : f32 to vector<1x512xf32>
    %100 = arith.mulf %99, %97 : vector<1x512xf32>
    %101 = arith.addf %88, %100 : vector<1x512xf32>
    %c34 = arith.constant 34 : index
    %102 = memref.load %arg2[%c34] : memref<81xf32, #tpu.memory_space<smem>>
    %103 = vector.broadcast %102 : f32 to vector<1x512xf32>
    %104 = arith.mulf %103, %97 : vector<1x512xf32>
    %105 = arith.addf %92, %104 : vector<1x512xf32>
    %c61 = arith.constant 61 : index
    %106 = memref.load %arg2[%c61] : memref<81xf32, #tpu.memory_space<smem>>
    %107 = vector.broadcast %106 : f32 to vector<1x512xf32>
    %108 = arith.mulf %107, %97 : vector<1x512xf32>
    %109 = arith.addf %96, %108 : vector<1x512xf32>
    %c8 = arith.constant 8 : index
    %c0_19 = arith.constant 0 : index
    %110 = vector.load %arg1[%c8, %c0_19] : memref<27x512xf32, #tpu.memory_space<vmem>>, vector<1x512xf32>
    %c8_20 = arith.constant 8 : index
    %111 = memref.load %arg2[%c8_20] : memref<81xf32, #tpu.memory_space<smem>>
    %112 = vector.broadcast %111 : f32 to vector<1x512xf32>
    %113 = arith.mulf %112, %110 : vector<1x512xf32>
    %114 = arith.addf %101, %113 : vector<1x512xf32>
    %c35 = arith.constant 35 : index
    %115 = memref.load %arg2[%c35] : memref<81xf32, #tpu.memory_space<smem>>
    %116 = vector.broadcast %115 : f32 to vector<1x512xf32>
    %117 = arith.mulf %116, %110 : vector<1x512xf32>
    %118 = arith.addf %105, %117 : vector<1x512xf32>
    %c62 = arith.constant 62 : index
    %119 = memref.load %arg2[%c62] : memref<81xf32, #tpu.memory_space<smem>>
    %120 = vector.broadcast %119 : f32 to vector<1x512xf32>
    %121 = arith.mulf %120, %110 : vector<1x512xf32>
    %122 = arith.addf %109, %121 : vector<1x512xf32>
    %c9 = arith.constant 9 : index
    %c0_21 = arith.constant 0 : index
    %123 = vector.load %arg1[%c9, %c0_21] : memref<27x512xf32, #tpu.memory_space<vmem>>, vector<1x512xf32>
    %c9_22 = arith.constant 9 : index
    %124 = memref.load %arg2[%c9_22] : memref<81xf32, #tpu.memory_space<smem>>
    %125 = vector.broadcast %124 : f32 to vector<1x512xf32>
    %126 = arith.mulf %125, %123 : vector<1x512xf32>
    %127 = arith.addf %114, %126 : vector<1x512xf32>
    %c36 = arith.constant 36 : index
    %128 = memref.load %arg2[%c36] : memref<81xf32, #tpu.memory_space<smem>>
    %129 = vector.broadcast %128 : f32 to vector<1x512xf32>
    %130 = arith.mulf %129, %123 : vector<1x512xf32>
    %131 = arith.addf %118, %130 : vector<1x512xf32>
    %c63 = arith.constant 63 : index
    %132 = memref.load %arg2[%c63] : memref<81xf32, #tpu.memory_space<smem>>
    %133 = vector.broadcast %132 : f32 to vector<1x512xf32>
    %134 = arith.mulf %133, %123 : vector<1x512xf32>
    %135 = arith.addf %122, %134 : vector<1x512xf32>
    %c10 = arith.constant 10 : index
    %c0_23 = arith.constant 0 : index
    %136 = vector.load %arg1[%c10, %c0_23] : memref<27x512xf32, #tpu.memory_space<vmem>>, vector<1x512xf32>
    %c10_24 = arith.constant 10 : index
    %137 = memref.load %arg2[%c10_24] : memref<81xf32, #tpu.memory_space<smem>>
    %138 = vector.broadcast %137 : f32 to vector<1x512xf32>
    %139 = arith.mulf %138, %136 : vector<1x512xf32>
    %140 = arith.addf %127, %139 : vector<1x512xf32>
    %c37 = arith.constant 37 : index
    %141 = memref.load %arg2[%c37] : memref<81xf32, #tpu.memory_space<smem>>
    %142 = vector.broadcast %141 : f32 to vector<1x512xf32>
    %143 = arith.mulf %142, %136 : vector<1x512xf32>
    %144 = arith.addf %131, %143 : vector<1x512xf32>
    %c64 = arith.constant 64 : index
    %145 = memref.load %arg2[%c64] : memref<81xf32, #tpu.memory_space<smem>>
    %146 = vector.broadcast %145 : f32 to vector<1x512xf32>
    %147 = arith.mulf %146, %136 : vector<1x512xf32>
    %148 = arith.addf %135, %147 : vector<1x512xf32>
    %c11 = arith.constant 11 : index
    %c0_25 = arith.constant 0 : index
    %149 = vector.load %arg1[%c11, %c0_25] : memref<27x512xf32, #tpu.memory_space<vmem>>, vector<1x512xf32>
    %c11_26 = arith.constant 11 : index
    %150 = memref.load %arg2[%c11_26] : memref<81xf32, #tpu.memory_space<smem>>
    %151 = vector.broadcast %150 : f32 to vector<1x512xf32>
    %152 = arith.mulf %151, %149 : vector<1x512xf32>
    %153 = arith.addf %140, %152 : vector<1x512xf32>
    %c38 = arith.constant 38 : index
    %154 = memref.load %arg2[%c38] : memref<81xf32, #tpu.memory_space<smem>>
    %155 = vector.broadcast %154 : f32 to vector<1x512xf32>
    %156 = arith.mulf %155, %149 : vector<1x512xf32>
    %157 = arith.addf %144, %156 : vector<1x512xf32>
    %c65 = arith.constant 65 : index
    %158 = memref.load %arg2[%c65] : memref<81xf32, #tpu.memory_space<smem>>
    %159 = vector.broadcast %158 : f32 to vector<1x512xf32>
    %160 = arith.mulf %159, %149 : vector<1x512xf32>
    %161 = arith.addf %148, %160 : vector<1x512xf32>
    %c12 = arith.constant 12 : index
    %c0_27 = arith.constant 0 : index
    %162 = vector.load %arg1[%c12, %c0_27] : memref<27x512xf32, #tpu.memory_space<vmem>>, vector<1x512xf32>
    %c12_28 = arith.constant 12 : index
    %163 = memref.load %arg2[%c12_28] : memref<81xf32, #tpu.memory_space<smem>>
    %164 = vector.broadcast %163 : f32 to vector<1x512xf32>
    %165 = arith.mulf %164, %162 : vector<1x512xf32>
    %166 = arith.addf %153, %165 : vector<1x512xf32>
    %c39 = arith.constant 39 : index
    %167 = memref.load %arg2[%c39] : memref<81xf32, #tpu.memory_space<smem>>
    %168 = vector.broadcast %167 : f32 to vector<1x512xf32>
    %169 = arith.mulf %168, %162 : vector<1x512xf32>
    %170 = arith.addf %157, %169 : vector<1x512xf32>
    %c66 = arith.constant 66 : index
    %171 = memref.load %arg2[%c66] : memref<81xf32, #tpu.memory_space<smem>>
    %172 = vector.broadcast %171 : f32 to vector<1x512xf32>
    %173 = arith.mulf %172, %162 : vector<1x512xf32>
    %174 = arith.addf %161, %173 : vector<1x512xf32>
    %c13 = arith.constant 13 : index
    %c0_29 = arith.constant 0 : index
    %175 = vector.load %arg1[%c13, %c0_29] : memref<27x512xf32, #tpu.memory_space<vmem>>, vector<1x512xf32>
    %c13_30 = arith.constant 13 : index
    %176 = memref.load %arg2[%c13_30] : memref<81xf32, #tpu.memory_space<smem>>
    %177 = vector.broadcast %176 : f32 to vector<1x512xf32>
    %178 = arith.mulf %177, %175 : vector<1x512xf32>
    %179 = arith.addf %166, %178 : vector<1x512xf32>
    %c40 = arith.constant 40 : index
    %180 = memref.load %arg2[%c40] : memref<81xf32, #tpu.memory_space<smem>>
    %181 = vector.broadcast %180 : f32 to vector<1x512xf32>
    %182 = arith.mulf %181, %175 : vector<1x512xf32>
    %183 = arith.addf %170, %182 : vector<1x512xf32>
    %c67 = arith.constant 67 : index
    %184 = memref.load %arg2[%c67] : memref<81xf32, #tpu.memory_space<smem>>
    %185 = vector.broadcast %184 : f32 to vector<1x512xf32>
    %186 = arith.mulf %185, %175 : vector<1x512xf32>
    %187 = arith.addf %174, %186 : vector<1x512xf32>
    %c14 = arith.constant 14 : index
    %c0_31 = arith.constant 0 : index
    %188 = vector.load %arg1[%c14, %c0_31] : memref<27x512xf32, #tpu.memory_space<vmem>>, vector<1x512xf32>
    %c14_32 = arith.constant 14 : index
    %189 = memref.load %arg2[%c14_32] : memref<81xf32, #tpu.memory_space<smem>>
    %190 = vector.broadcast %189 : f32 to vector<1x512xf32>
    %191 = arith.mulf %190, %188 : vector<1x512xf32>
    %192 = arith.addf %179, %191 : vector<1x512xf32>
    %c41 = arith.constant 41 : index
    %193 = memref.load %arg2[%c41] : memref<81xf32, #tpu.memory_space<smem>>
    %194 = vector.broadcast %193 : f32 to vector<1x512xf32>
    %195 = arith.mulf %194, %188 : vector<1x512xf32>
    %196 = arith.addf %183, %195 : vector<1x512xf32>
    %c68 = arith.constant 68 : index
    %197 = memref.load %arg2[%c68] : memref<81xf32, #tpu.memory_space<smem>>
    %198 = vector.broadcast %197 : f32 to vector<1x512xf32>
    %199 = arith.mulf %198, %188 : vector<1x512xf32>
    %200 = arith.addf %187, %199 : vector<1x512xf32>
    %c15 = arith.constant 15 : index
    %c0_33 = arith.constant 0 : index
    %201 = vector.load %arg1[%c15, %c0_33] : memref<27x512xf32, #tpu.memory_space<vmem>>, vector<1x512xf32>
    %c15_34 = arith.constant 15 : index
    %202 = memref.load %arg2[%c15_34] : memref<81xf32, #tpu.memory_space<smem>>
    %203 = vector.broadcast %202 : f32 to vector<1x512xf32>
    %204 = arith.mulf %203, %201 : vector<1x512xf32>
    %205 = arith.addf %192, %204 : vector<1x512xf32>
    %c42 = arith.constant 42 : index
    %206 = memref.load %arg2[%c42] : memref<81xf32, #tpu.memory_space<smem>>
    %207 = vector.broadcast %206 : f32 to vector<1x512xf32>
    %208 = arith.mulf %207, %201 : vector<1x512xf32>
    %209 = arith.addf %196, %208 : vector<1x512xf32>
    %c69 = arith.constant 69 : index
    %210 = memref.load %arg2[%c69] : memref<81xf32, #tpu.memory_space<smem>>
    %211 = vector.broadcast %210 : f32 to vector<1x512xf32>
    %212 = arith.mulf %211, %201 : vector<1x512xf32>
    %213 = arith.addf %200, %212 : vector<1x512xf32>
    %c16 = arith.constant 16 : index
    %c0_35 = arith.constant 0 : index
    %214 = vector.load %arg1[%c16, %c0_35] : memref<27x512xf32, #tpu.memory_space<vmem>>, vector<1x512xf32>
    %c16_36 = arith.constant 16 : index
    %215 = memref.load %arg2[%c16_36] : memref<81xf32, #tpu.memory_space<smem>>
    %216 = vector.broadcast %215 : f32 to vector<1x512xf32>
    %217 = arith.mulf %216, %214 : vector<1x512xf32>
    %218 = arith.addf %205, %217 : vector<1x512xf32>
    %c43 = arith.constant 43 : index
    %219 = memref.load %arg2[%c43] : memref<81xf32, #tpu.memory_space<smem>>
    %220 = vector.broadcast %219 : f32 to vector<1x512xf32>
    %221 = arith.mulf %220, %214 : vector<1x512xf32>
    %222 = arith.addf %209, %221 : vector<1x512xf32>
    %c70 = arith.constant 70 : index
    %223 = memref.load %arg2[%c70] : memref<81xf32, #tpu.memory_space<smem>>
    %224 = vector.broadcast %223 : f32 to vector<1x512xf32>
    %225 = arith.mulf %224, %214 : vector<1x512xf32>
    %226 = arith.addf %213, %225 : vector<1x512xf32>
    %c17 = arith.constant 17 : index
    %c0_37 = arith.constant 0 : index
    %227 = vector.load %arg1[%c17, %c0_37] : memref<27x512xf32, #tpu.memory_space<vmem>>, vector<1x512xf32>
    %c17_38 = arith.constant 17 : index
    %228 = memref.load %arg2[%c17_38] : memref<81xf32, #tpu.memory_space<smem>>
    %229 = vector.broadcast %228 : f32 to vector<1x512xf32>
    %230 = arith.mulf %229, %227 : vector<1x512xf32>
    %231 = arith.addf %218, %230 : vector<1x512xf32>
    %c44 = arith.constant 44 : index
    %232 = memref.load %arg2[%c44] : memref<81xf32, #tpu.memory_space<smem>>
    %233 = vector.broadcast %232 : f32 to vector<1x512xf32>
    %234 = arith.mulf %233, %227 : vector<1x512xf32>
    %235 = arith.addf %222, %234 : vector<1x512xf32>
    %c71 = arith.constant 71 : index
    %236 = memref.load %arg2[%c71] : memref<81xf32, #tpu.memory_space<smem>>
    %237 = vector.broadcast %236 : f32 to vector<1x512xf32>
    %238 = arith.mulf %237, %227 : vector<1x512xf32>
    %239 = arith.addf %226, %238 : vector<1x512xf32>
    %c18 = arith.constant 18 : index
    %c0_39 = arith.constant 0 : index
    %240 = vector.load %arg1[%c18, %c0_39] : memref<27x512xf32, #tpu.memory_space<vmem>>, vector<1x512xf32>
    %c18_40 = arith.constant 18 : index
    %241 = memref.load %arg2[%c18_40] : memref<81xf32, #tpu.memory_space<smem>>
    %242 = vector.broadcast %241 : f32 to vector<1x512xf32>
    %243 = arith.mulf %242, %240 : vector<1x512xf32>
    %244 = arith.addf %231, %243 : vector<1x512xf32>
    %c45 = arith.constant 45 : index
    %245 = memref.load %arg2[%c45] : memref<81xf32, #tpu.memory_space<smem>>
    %246 = vector.broadcast %245 : f32 to vector<1x512xf32>
    %247 = arith.mulf %246, %240 : vector<1x512xf32>
    %248 = arith.addf %235, %247 : vector<1x512xf32>
    %c72 = arith.constant 72 : index
    %249 = memref.load %arg2[%c72] : memref<81xf32, #tpu.memory_space<smem>>
    %250 = vector.broadcast %249 : f32 to vector<1x512xf32>
    %251 = arith.mulf %250, %240 : vector<1x512xf32>
    %252 = arith.addf %239, %251 : vector<1x512xf32>
    %c19 = arith.constant 19 : index
    %c0_41 = arith.constant 0 : index
    %253 = vector.load %arg1[%c19, %c0_41] : memref<27x512xf32, #tpu.memory_space<vmem>>, vector<1x512xf32>
    %c19_42 = arith.constant 19 : index
    %254 = memref.load %arg2[%c19_42] : memref<81xf32, #tpu.memory_space<smem>>
    %255 = vector.broadcast %254 : f32 to vector<1x512xf32>
    %256 = arith.mulf %255, %253 : vector<1x512xf32>
    %257 = arith.addf %244, %256 : vector<1x512xf32>
    %c46 = arith.constant 46 : index
    %258 = memref.load %arg2[%c46] : memref<81xf32, #tpu.memory_space<smem>>
    %259 = vector.broadcast %258 : f32 to vector<1x512xf32>
    %260 = arith.mulf %259, %253 : vector<1x512xf32>
    %261 = arith.addf %248, %260 : vector<1x512xf32>
    %c73 = arith.constant 73 : index
    %262 = memref.load %arg2[%c73] : memref<81xf32, #tpu.memory_space<smem>>
    %263 = vector.broadcast %262 : f32 to vector<1x512xf32>
    %264 = arith.mulf %263, %253 : vector<1x512xf32>
    %265 = arith.addf %252, %264 : vector<1x512xf32>
    %c20 = arith.constant 20 : index
    %c0_43 = arith.constant 0 : index
    %266 = vector.load %arg1[%c20, %c0_43] : memref<27x512xf32, #tpu.memory_space<vmem>>, vector<1x512xf32>
    %c20_44 = arith.constant 20 : index
    %267 = memref.load %arg2[%c20_44] : memref<81xf32, #tpu.memory_space<smem>>
    %268 = vector.broadcast %267 : f32 to vector<1x512xf32>
    %269 = arith.mulf %268, %266 : vector<1x512xf32>
    %270 = arith.addf %257, %269 : vector<1x512xf32>
    %c47 = arith.constant 47 : index
    %271 = memref.load %arg2[%c47] : memref<81xf32, #tpu.memory_space<smem>>
    %272 = vector.broadcast %271 : f32 to vector<1x512xf32>
    %273 = arith.mulf %272, %266 : vector<1x512xf32>
    %274 = arith.addf %261, %273 : vector<1x512xf32>
    %c74 = arith.constant 74 : index
    %275 = memref.load %arg2[%c74] : memref<81xf32, #tpu.memory_space<smem>>
    %276 = vector.broadcast %275 : f32 to vector<1x512xf32>
    %277 = arith.mulf %276, %266 : vector<1x512xf32>
    %278 = arith.addf %265, %277 : vector<1x512xf32>
    %c21 = arith.constant 21 : index
    %c0_45 = arith.constant 0 : index
    %279 = vector.load %arg1[%c21, %c0_45] : memref<27x512xf32, #tpu.memory_space<vmem>>, vector<1x512xf32>
    %c21_46 = arith.constant 21 : index
    %280 = memref.load %arg2[%c21_46] : memref<81xf32, #tpu.memory_space<smem>>
    %281 = vector.broadcast %280 : f32 to vector<1x512xf32>
    %282 = arith.mulf %281, %279 : vector<1x512xf32>
    %283 = arith.addf %270, %282 : vector<1x512xf32>
    %c48 = arith.constant 48 : index
    %284 = memref.load %arg2[%c48] : memref<81xf32, #tpu.memory_space<smem>>
    %285 = vector.broadcast %284 : f32 to vector<1x512xf32>
    %286 = arith.mulf %285, %279 : vector<1x512xf32>
    %287 = arith.addf %274, %286 : vector<1x512xf32>
    %c75 = arith.constant 75 : index
    %288 = memref.load %arg2[%c75] : memref<81xf32, #tpu.memory_space<smem>>
    %289 = vector.broadcast %288 : f32 to vector<1x512xf32>
    %290 = arith.mulf %289, %279 : vector<1x512xf32>
    %291 = arith.addf %278, %290 : vector<1x512xf32>
    %c22 = arith.constant 22 : index
    %c0_47 = arith.constant 0 : index
    %292 = vector.load %arg1[%c22, %c0_47] : memref<27x512xf32, #tpu.memory_space<vmem>>, vector<1x512xf32>
    %c22_48 = arith.constant 22 : index
    %293 = memref.load %arg2[%c22_48] : memref<81xf32, #tpu.memory_space<smem>>
    %294 = vector.broadcast %293 : f32 to vector<1x512xf32>
    %295 = arith.mulf %294, %292 : vector<1x512xf32>
    %296 = arith.addf %283, %295 : vector<1x512xf32>
    %c49 = arith.constant 49 : index
    %297 = memref.load %arg2[%c49] : memref<81xf32, #tpu.memory_space<smem>>
    %298 = vector.broadcast %297 : f32 to vector<1x512xf32>
    %299 = arith.mulf %298, %292 : vector<1x512xf32>
    %300 = arith.addf %287, %299 : vector<1x512xf32>
    %c76 = arith.constant 76 : index
    %301 = memref.load %arg2[%c76] : memref<81xf32, #tpu.memory_space<smem>>
    %302 = vector.broadcast %301 : f32 to vector<1x512xf32>
    %303 = arith.mulf %302, %292 : vector<1x512xf32>
    %304 = arith.addf %291, %303 : vector<1x512xf32>
    %c23 = arith.constant 23 : index
    %c0_49 = arith.constant 0 : index
    %305 = vector.load %arg1[%c23, %c0_49] : memref<27x512xf32, #tpu.memory_space<vmem>>, vector<1x512xf32>
    %c23_50 = arith.constant 23 : index
    %306 = memref.load %arg2[%c23_50] : memref<81xf32, #tpu.memory_space<smem>>
    %307 = vector.broadcast %306 : f32 to vector<1x512xf32>
    %308 = arith.mulf %307, %305 : vector<1x512xf32>
    %309 = arith.addf %296, %308 : vector<1x512xf32>
    %c50 = arith.constant 50 : index
    %310 = memref.load %arg2[%c50] : memref<81xf32, #tpu.memory_space<smem>>
    %311 = vector.broadcast %310 : f32 to vector<1x512xf32>
    %312 = arith.mulf %311, %305 : vector<1x512xf32>
    %313 = arith.addf %300, %312 : vector<1x512xf32>
    %c77 = arith.constant 77 : index
    %314 = memref.load %arg2[%c77] : memref<81xf32, #tpu.memory_space<smem>>
    %315 = vector.broadcast %314 : f32 to vector<1x512xf32>
    %316 = arith.mulf %315, %305 : vector<1x512xf32>
    %317 = arith.addf %304, %316 : vector<1x512xf32>
    %c24 = arith.constant 24 : index
    %c0_51 = arith.constant 0 : index
    %318 = vector.load %arg1[%c24, %c0_51] : memref<27x512xf32, #tpu.memory_space<vmem>>, vector<1x512xf32>
    %c24_52 = arith.constant 24 : index
    %319 = memref.load %arg2[%c24_52] : memref<81xf32, #tpu.memory_space<smem>>
    %320 = vector.broadcast %319 : f32 to vector<1x512xf32>
    %321 = arith.mulf %320, %318 : vector<1x512xf32>
    %322 = arith.addf %309, %321 : vector<1x512xf32>
    %c51 = arith.constant 51 : index
    %323 = memref.load %arg2[%c51] : memref<81xf32, #tpu.memory_space<smem>>
    %324 = vector.broadcast %323 : f32 to vector<1x512xf32>
    %325 = arith.mulf %324, %318 : vector<1x512xf32>
    %326 = arith.addf %313, %325 : vector<1x512xf32>
    %c78 = arith.constant 78 : index
    %327 = memref.load %arg2[%c78] : memref<81xf32, #tpu.memory_space<smem>>
    %328 = vector.broadcast %327 : f32 to vector<1x512xf32>
    %329 = arith.mulf %328, %318 : vector<1x512xf32>
    %330 = arith.addf %317, %329 : vector<1x512xf32>
    %c25 = arith.constant 25 : index
    %c0_53 = arith.constant 0 : index
    %331 = vector.load %arg1[%c25, %c0_53] : memref<27x512xf32, #tpu.memory_space<vmem>>, vector<1x512xf32>
    %c25_54 = arith.constant 25 : index
    %332 = memref.load %arg2[%c25_54] : memref<81xf32, #tpu.memory_space<smem>>
    %333 = vector.broadcast %332 : f32 to vector<1x512xf32>
    %334 = arith.mulf %333, %331 : vector<1x512xf32>
    %335 = arith.addf %322, %334 : vector<1x512xf32>
    %c52 = arith.constant 52 : index
    %336 = memref.load %arg2[%c52] : memref<81xf32, #tpu.memory_space<smem>>
    %337 = vector.broadcast %336 : f32 to vector<1x512xf32>
    %338 = arith.mulf %337, %331 : vector<1x512xf32>
    %339 = arith.addf %326, %338 : vector<1x512xf32>
    %c79 = arith.constant 79 : index
    %340 = memref.load %arg2[%c79] : memref<81xf32, #tpu.memory_space<smem>>
    %341 = vector.broadcast %340 : f32 to vector<1x512xf32>
    %342 = arith.mulf %341, %331 : vector<1x512xf32>
    %343 = arith.addf %330, %342 : vector<1x512xf32>
    %c26 = arith.constant 26 : index
    %c0_55 = arith.constant 0 : index
    %344 = vector.load %arg1[%c26, %c0_55] : memref<27x512xf32, #tpu.memory_space<vmem>>, vector<1x512xf32>
    %c26_56 = arith.constant 26 : index
    %345 = memref.load %arg2[%c26_56] : memref<81xf32, #tpu.memory_space<smem>>
    %346 = vector.broadcast %345 : f32 to vector<1x512xf32>
    %347 = arith.mulf %346, %344 : vector<1x512xf32>
    %348 = arith.addf %335, %347 : vector<1x512xf32>
    %c53 = arith.constant 53 : index
    %349 = memref.load %arg2[%c53] : memref<81xf32, #tpu.memory_space<smem>>
    %350 = vector.broadcast %349 : f32 to vector<1x512xf32>
    %351 = arith.mulf %350, %344 : vector<1x512xf32>
    %352 = arith.addf %339, %351 : vector<1x512xf32>
    %c80 = arith.constant 80 : index
    %353 = memref.load %arg2[%c80] : memref<81xf32, #tpu.memory_space<smem>>
    %354 = vector.broadcast %353 : f32 to vector<1x512xf32>
    %355 = arith.mulf %354, %344 : vector<1x512xf32>
    %356 = arith.addf %343, %355 : vector<1x512xf32>
    %c0_57 = arith.constant 0 : index
    %c0_58 = arith.constant 0 : index
    %357 = vector.load %arg4[%c0_57, %c0_58] : memref<3x512xf32, #tpu.memory_space<vmem>>, vector<1x512xf32>
    tpu.vector_store %arg4[%c0_57, %c0_58], %348 {strides = array<i32>} : memref<3x512xf32, #tpu.memory_space<vmem>>, vector<1x512xf32>,
    %c1_59 = arith.constant 1 : index
    %c0_60 = arith.constant 0 : index
    %358 = vector.load %arg4[%c1_59, %c0_60] : memref<3x512xf32, #tpu.memory_space<vmem>>, vector<1x512xf32>
    tpu.vector_store %arg4[%c1_59, %c0_60], %352 {strides = array<i32>} : memref<3x512xf32, #tpu.memory_space<vmem>>, vector<1x512xf32>,
    %c2_61 = arith.constant 2 : index
    %c0_62 = arith.constant 0 : index
    %359 = vector.load %arg4[%c2_61, %c0_62] : memref<3x512xf32, #tpu.memory_space<vmem>>, vector<1x512xf32>
    tpu.vector_store %arg4[%c2_61, %c0_62], %356 {strides = array<i32>} : memref<3x512xf32, #tpu.memory_space<vmem>>, vector<1x512xf32>,
    return
  }
  func.func @transform_0(%arg0: i32) -> (i32, i32) {
    %c0_i32 = arith.constant 0 : i32
    %c0_i32_0 = arith.constant 0 : i32
    %c0_i32_1 = arith.constant 0 : i32
    return %c0_i32, %c0_i32_0 : i32, i32
  }
  func.func @transform_1(%arg0: i32) -> i32 {
    %c0_i32 = arith.constant 0 : i32
    %c0_i32_0 = arith.constant 0 : i32
    return %c0_i32 : i32
  }
  func.func @transform_2(%arg0: i32) -> i32 {
    %c0_i32 = arith.constant 0 : i32
    %c0_i32_0 = arith.constant 0 : i32
    return %c0_i32 : i32
  }
  func.func @transform_3(%arg0: i32) -> (i32, i32) {
    %c0_i32 = arith.constant 0 : i32
    %c0_i32_0 = arith.constant 0 : i32
    %c0_i32_1 = arith.constant 0 : i32
    return %c0_i32, %c0_i32_0 : i32, i32
  }
}

</mosaic_0001>

<llo_original>
// kernel: tpu_custom_call.1
$region0: #{tpu_custom_call.1}
  #allocation0 [shape = 'u32[]', space=smem, size = 0x4, offset = 0x4, fixed_abs, tag = 'smem constant byte address 0x4 - core index']
  #allocation1 [shape = 'u32[72,128]{1,0:T(1,128)}', space=vmem, size = 0x9000, scoped, tag = 'internal scratch']
  %s0 = inlined_call_operand.hbm [shape: f32[27,512], index: 0, kind: input, shape index: {}]
  %s1 = inlined_call_operand.hbm [shape: f32[81], index: 1, kind: input, shape index: {}]
  %s2 = inlined_call_operand.vmem [shape: f32[3], index: 2, kind: input, shape index: {}]
  %s3 = inlined_call_operand.hbm [shape: f32[3,512], index: 3, kind: output, shape index: {}]
  %s4 = sld [smem:[#allocation0]]
  $region34: #{tpu_custom_call.1} parent=0
    _
  %s6 = ssub.s32 1, %s4
  %s7 = scalar_select 0, %s6, %s4
  $region1: #{tpu_custom_call.1} parent=0
    #allocation2 [shape = 'u8[65536]{0}', space=vmem, size = 0x10000, scoped, tag = 'input window, operand 0, single buffered']
    #allocation3 [shape = 's32[1]{0}', space=sflag, size = 0x4, scoped, tag = 'scoped memory for tpu_custom_call.1']
    #allocation4 [shape = 's32[1]{0}', space=sflag, size = 0x4, scoped, tag = 'scoped memory for tpu_custom_call.1']
    #allocation5 [shape = 's32[1]{0}', space=sflag, size = 0x4, scoped, tag = 'scoped memory for tpu_custom_call.1']
    #allocation6 [shape = 's32[1]{0}', space=sflag, size = 0x4, scoped, tag = 'scoped memory for tpu_custom_call.1']
    #allocation7 [shape = 'u8[512]{0}', space=smem, size = 0x200, scoped, tag = 'input window, operand 1, single buffered']
    #allocation8 [shape = 'u8[512]{0}', space=smem, size = 0x200, scoped, tag = 'input window, operand 2, single buffered']
    #allocation9 [shape = 'u8[8192]{0}', space=vmem, size = 0x2000, scoped, tag = 'output window, operand 0, single buffered']
    %8 = vsyncpa [#allocation3], 0
    %9 = vsyncpa [#allocation5], 0
    %10 = vsyncpa [#allocation6], 0
    %11 = vsyncpa [#allocation4], 0
    // Predicated region
    $region2: #{tpu_custom_call.1} parent=1 // pred_check
      _
    $region3: #{tpu_custom_call.1} parent=1 // pred_check_branch
      %13 = sbr.rel (0) target = $region5
    $region4: #{tpu_custom_call.1} parent=1 // pred_region
      %15 = vsyncadd [#allocation3], 0
      %s16 = sshll.u32 %s0, 4
      %s17 = int_to_ptr.hbm [resolvable:$true] %s16
      %s18 = sshll.u32 [#allocation2], 4
      %s19 = int_to_ptr.vmem [resolvable:$true] %s18
      %24 = dma.hbm_to_vmem [thread:$0]  %s17, 2048, %s19, [#allocation3], 512, 512, 32
    $region5: #{tpu_custom_call.1} parent=1 // pred_fallthru
      _
    // Predicated region
    $region6: #{tpu_custom_call.1} parent=1 // pred_check
      _
    $region7: #{tpu_custom_call.1} parent=1 // pred_check_branch
      %26 = sbr.rel (0) target = $region9
    $region8: #{tpu_custom_call.1} parent=1 // pred_region
      %28 = vsyncadd [#allocation5], 0
      %s30 = sshll.u32 %s1, 4
      %s31 = int_to_ptr.hbm [resolvable:$true] %s30
      %33 = dma.hbm_to_smem %s31, 16, [#allocation7], [#allocation5]
    $region9: #{tpu_custom_call.1} parent=1 // pred_fallthru
      _
    // Predicated region
    $region10: #{tpu_custom_call.1} parent=1 // pred_check
      _
    $region11: #{tpu_custom_call.1} parent=1 // pred_check_branch
      %35 = sbr.rel (0) target = $region13
    $region12: #{tpu_custom_call.1} parent=1 // pred_region
      %37 = vsyncadd [#allocation6], 0
      %s39 = sshll.u32 %s2, 4
      %s40 = int_to_ptr.vmem [resolvable:$true] %s39
      %42 = dma.vmem_to_smem %s40, 16, [#allocation8], [#allocation6]
    $region13: #{tpu_custom_call.1} parent=1 // pred_fallthru
      _
    // Predicated region
    $region14: #{tpu_custom_call.1} parent=1 // pred_check
      _
    $region15: #{tpu_custom_call.1} parent=1 // pred_check_branch
      %44 = sbr.rel (0) target = $region17
    $region16: #{tpu_custom_call.1} parent=1 // pred_region
      %46 = dma.done [#allocation3], 2048
    $region17: #{tpu_custom_call.1} parent=1 // pred_fallthru
      _
    // Predicated region
    $region18: #{tpu_custom_call.1} parent=1 // pred_check
      _
    $region19: #{tpu_custom_call.1} parent=1 // pred_check_branch
      %48 = sbr.rel (0) target = $region21
    $region20: #{tpu_custom_call.1} parent=1 // pred_region
      %50 = dma.done [#allocation5], 16
    $region21: #{tpu_custom_call.1} parent=1 // pred_fallthru
      _
    // Predicated region
    $region22: #{tpu_custom_call.1} parent=1 // pred_check
      _
    $region23: #{tpu_custom_call.1} parent=1 // pred_check_branch
      %52 = sbr.rel (0) target = $region25
    $region24: #{tpu_custom_call.1} parent=1 // pred_region
      %54 = dma.done [#allocation6], 16
    $region25: #{tpu_custom_call.1} parent=1 // pred_fallthru
      _
    %55 = sfence
    %s56 = sld [smem:[#allocation8]]
    %v57 = vstv %s56
    %s58 = sld [smem:[#allocation8 + $0x1]]
    %v59 = vstv %s58
    %s60 = sld [smem:[#allocation8 + $0x2]]
    %v61 = vstv %s60
    %v62 = vld [vmem:[#allocation2] ss:$8 sm:$0xf]
    %s63 = sld [smem:[#allocation7]]
    %v64 = vstv %s63
    %v65 = vmul.f32 %v64, %v62
    %v66 = vadd.f32 %v57, %v65
    %s67 = sld [smem:[#allocation7 + $0x1b]]
    %v68 = vstv %s67
    %v69 = vmul.f32 %v68, %v62
    %v70 = vadd.f32 %v59, %v69
    %s71 = sld [smem:[#allocation7 + $0x36]]
    %v72 = vstv %s71
    %v73 = vmul.f32 %v72, %v62
    %v74 = vadd.f32 %v61, %v73
    %s75 = scalar_lea.vmem [#allocation2], 1
    %v76 = vld [vmem:[%s75] ss:$8 sm:$0xf]
    %s77 = sld [smem:[#allocation7 + $0x1]]
    %v78 = vstv %s77
    %v79 = vmul.f32 %v78, %v76
    %v80 = vadd.f32 %v66, %v79
    %s81 = sld [smem:[#allocation7 + $0x1c]]
    %v82 = vstv %s81
    %v83 = vmul.f32 %v82, %v76
    %v84 = vadd.f32 %v70, %v83
    %s85 = sld [smem:[#allocation7 + $0x37]]
    %v86 = vstv %s85
    %v87 = vmul.f32 %v86, %v76
    %v88 = vadd.f32 %v74, %v87
    %s89 = scalar_lea.vmem [#allocation2], 2
    %v90 = vld [vmem:[%s89] ss:$8 sm:$0xf]
    %s91 = sld [smem:[#allocation7 + $0x2]]
    %v92 = vstv %s91
    %v93 = vmul.f32 %v92, %v90
    %v94 = vadd.f32 %v80, %v93
    %s95 = sld [smem:[#allocation7 + $0x1d]]
    %v96 = vstv %s95
    %v97 = vmul.f32 %v96, %v90
    %v98 = vadd.f32 %v84, %v97
    %s99 = sld [smem:[#allocation7 + $0x38]]
    %v100 = vstv %s99
    %v101 = vmul.f32 %v100, %v90
    %v102 = vadd.f32 %v88, %v101
    %s103 = scalar_lea.vmem [#allocation2], 3
    %v104 = vld [vmem:[%s103] ss:$8 sm:$0xf]
    %s105 = sld [smem:[#allocation7 + $0x3]]
    %v106 = vstv %s105
    %v107 = vmul.f32 %v106, %v104
    %v108 = vadd.f32 %v94, %v107
    %s109 = sld [smem:[#allocation7 + $0x1e]]
    %v110 = vstv %s109
    %v111 = vmul.f32 %v110, %v104
    %v112 = vadd.f32 %v98, %v111
    %s113 = sld [smem:[#allocation7 + $0x39]]
    %v114 = vstv %s113
    %v115 = vmul.f32 %v114, %v104
    %v116 = vadd.f32 %v102, %v115
    %s117 = scalar_lea.vmem [#allocation2], 4
    %v118 = vld [vmem:[%s117] ss:$8 sm:$0xf]
    %s119 = sld [smem:[#allocation7 + $0x4]]
    %v120 = vstv %s119
    %v121 = vmul.f32 %v120, %v118
    %v122 = vadd.f32 %v108, %v121
    %s123 = sld [smem:[#allocation7 + $0x1f]]
    %v124 = vstv %s123
    %v125 = vmul.f32 %v124, %v118
    %v126 = vadd.f32 %v112, %v125
    %s127 = sld [smem:[#allocation7 + $0x3a]]
    %v128 = vstv %s127
    %v129 = vmul.f32 %v128, %v118
    %v130 = vadd.f32 %v116, %v129
    %s131 = scalar_lea.vmem [#allocation2], 5
    %v132 = vld [vmem:[%s131] ss:$8 sm:$0xf]
    %s133 = sld [smem:[#allocation7 + $0x5]]
    %v134 = vstv %s133
    %v135 = vmul.f32 %v134, %v132
    %v136 = vadd.f32 %v122, %v135
    %s137 = sld [smem:[#allocation7 + $0x20]]
    %v138 = vstv %s137
    %v139 = vmul.f32 %v138, %v132
    %v140 = vadd.f32 %v126, %v139
    %s141 = sld [smem:[#allocation7 + $0x3b]]
    %v142 = vstv %s141
    %v143 = vmul.f32 %v142, %v132
    %v144 = vadd.f32 %v130, %v143
    %s145 = scalar_lea.vmem [#allocation2], 6
    %v146 = vld [vmem:[%s145] ss:$8 sm:$0xf]
    %s147 = sld [smem:[#allocation7 + $0x6]]
    %v148 = vstv %s147
    %v149 = vmul.f32 %v148, %v146
    %v150 = vadd.f32 %v136, %v149
    %s151 = sld [smem:[#allocation7 + $0x21]]
    %v152 = vstv %s151
    %v153 = vmul.f32 %v152, %v146
    %v154 = vadd.f32 %v140, %v153
    %s155 = sld [smem:[#allocation7 + $0x3c]]
    %v156 = vstv %s155
    %v157 = vmul.f32 %v156, %v146
    %v158 = vadd.f32 %v144, %v157
    %s159 = scalar_lea.vmem [#allocation2], 7
    %v160 = vld [vmem:[%s159] ss:$8 sm:$0xf]
    %s161 = sld [smem:[#allocation7 + $0x7]]
    %v162 = vstv %s161
    %v163 = vmul.f32 %v162, %v160
    %v164 = vadd.f32 %v150, %v163
    %s165 = sld [smem:[#allocation7 + $0x22]]
    %v166 = vstv %s165
    %v167 = vmul.f32 %v166, %v160
    %v168 = vadd.f32 %v154, %v167
    %s169 = sld [smem:[#allocation7 + $0x3d]]
    %v170 = vstv %s169
    %v171 = vmul.f32 %v170, %v160
    %v172 = vadd.f32 %v158, %v171
    %s173 = scalar_lea.vmem [#allocation2], 32
    %v174 = vld [vmem:[%s173] ss:$8 sm:$0xf]
    %s175 = sld [smem:[#allocation7 + $0x8]]
    %v176 = vstv %s175
    %v177 = vmul.f32 %v176, %v174
    %v178 = vadd.f32 %v164, %v177
    %s179 = sld [smem:[#allocation7 + $0x23]]
    %v180 = vstv %s179
    %v181 = vmul.f32 %v180, %v174
    %v182 = vadd.f32 %v168, %v181
    %s183 = sld [smem:[#allocation7 + $0x3e]]
    %v184 = vstv %s183
    %v185 = vmul.f32 %v184, %v174
    %v186 = vadd.f32 %v172, %v185
    %s187 = scalar_lea.vmem [#allocation2], 33
    %v188 = vld [vmem:[%s187] ss:$8 sm:$0xf]
    %s189 = sld [smem:[#allocation7 + $0x9]]
    %v190 = vstv %s189
    %v191 = vmul.f32 %v190, %v188
    %v192 = vadd.f32 %v178, %v191
    %s193 = sld [smem:[#allocation7 + $0x24]]
    %v194 = vstv %s193
    %v195 = vmul.f32 %v194, %v188
    %v196 = vadd.f32 %v182, %v195
    %s197 = sld [smem:[#allocation7 + $0x3f]]
    %v198 = vstv %s197
    %v199 = vmul.f32 %v198, %v188
    %v200 = vadd.f32 %v186, %v199
    %s201 = scalar_lea.vmem [#allocation2], 34
    %v202 = vld [vmem:[%s201] ss:$8 sm:$0xf]
    %s203 = sld [smem:[#allocation7 + $0xa]]
    %v204 = vstv %s203
    %v205 = vmul.f32 %v204, %v202
    %v206 = vadd.f32 %v192, %v205
    %s207 = sld [smem:[#allocation7 + $0x25]]
    %v208 = vstv %s207
    %v209 = vmul.f32 %v208, %v202
    %v210 = vadd.f32 %v196, %v209
    %s211 = sld [smem:[#allocation7 + $0x40]]
    %v212 = vstv %s211
    %v213 = vmul.f32 %v212, %v202
    %v214 = vadd.f32 %v200, %v213
    %s215 = scalar_lea.vmem [#allocation2], 35
    %v216 = vld [vmem:[%s215] ss:$8 sm:$0xf]
    %s217 = sld [smem:[#allocation7 + $0xb]]
    %v218 = vstv %s217
    %v219 = vmul.f32 %v218, %v216
    %v220 = vadd.f32 %v206, %v219
    %s221 = sld [smem:[#allocation7 + $0x26]]
    %v222 = vstv %s221
    %v223 = vmul.f32 %v222, %v216
    %v224 = vadd.f32 %v210, %v223
    %s225 = sld [smem:[#allocation7 + $0x41]]
    %v226 = vstv %s225
    %v227 = vmul.f32 %v226, %v216
    %v228 = vadd.f32 %v214, %v227
    %s229 = scalar_lea.vmem [#allocation2], 36
    %v230 = vld [vmem:[%s229] ss:$8 sm:$0xf]
    %s231 = sld [smem:[#allocation7 + $0xc]]
    %v232 = vstv %s231
    %v233 = vmul.f32 %v232, %v230
    %v234 = vadd.f32 %v220, %v233
    %s235 = sld [smem:[#allocation7 + $0x27]]
    %v236 = vstv %s235
    %v237 = vmul.f32 %v236, %v230
    %v238 = vadd.f32 %v224, %v237
    %s239 = sld [smem:[#allocation7 + $0x42]]
    %v240 = vstv %s239
    %v241 = vmul.f32 %v240, %v230
    %v242 = vadd.f32 %v228, %v241
    %s243 = scalar_lea.vmem [#allocation2], 37
    %v244 = vld [vmem:[%s243] ss:$8 sm:$0xf]
    %s245 = sld [smem:[#allocation7 + $0xd]]
    %v246 = vstv %s245
    %v247 = vmul.f32 %v246, %v244
    %v248 = vadd.f32 %v234, %v247
    %s249 = sld [smem:[#allocation7 + $0x28]]
    %v250 = vstv %s249
    %v251 = vmul.f32 %v250, %v244
    %v252 = vadd.f32 %v238, %v251
    %s253 = sld [smem:[#allocation7 + $0x43]]
    %v254 = vstv %s253
    %v255 = vmul.f32 %v254, %v244
    %v256 = vadd.f32 %v242, %v255
    %s257 = scalar_lea.vmem [#allocation2], 38
    %v258 = vld [vmem:[%s257] ss:$8 sm:$0xf]
    %s259 = sld [smem:[#allocation7 + $0xe]]
    %v260 = vstv %s259
    %v261 = vmul.f32 %v260, %v258
    %v262 = vadd.f32 %v248, %v261
    %s263 = sld [smem:[#allocation7 + $0x29]]
    %v264 = vstv %s263
    %v265 = vmul.f32 %v264, %v258
    %v266 = vadd.f32 %v252, %v265
    %s267 = sld [smem:[#allocation7 + $0x44]]
    %v268 = vstv %s267
    %v269 = vmul.f32 %v268, %v258
    %v270 = vadd.f32 %v256, %v269
    %s271 = scalar_lea.vmem [#allocation2], 39
    %v272 = vld [vmem:[%s271] ss:$8 sm:$0xf]
    %s273 = sld [smem:[#allocation7 + $0xf]]
    %v274 = vstv %s273
    %v275 = vmul.f32 %v274, %v272
    %v276 = vadd.f32 %v262, %v275
    %s277 = sld [smem:[#allocation7 + $0x2a]]
    %v278 = vstv %s277
    %v279 = vmul.f32 %v278, %v272
    %v280 = vadd.f32 %v266, %v279
    %s281 = sld [smem:[#allocation7 + $0x45]]
    %v282 = vstv %s281
    %v283 = vmul.f32 %v282, %v272
    %v284 = vadd.f32 %v270, %v283
    %s285 = scalar_lea.vmem [#allocation2], 64
    %v286 = vld [vmem:[%s285] ss:$8 sm:$0xf]
    %s287 = sld [smem:[#allocation7 + $0x10]]
    %v288 = vstv %s287
    %v289 = vmul.f32 %v288, %v286
    %v290 = vadd.f32 %v276, %v289
    %s291 = sld [smem:[#allocation7 + $0x2b]]
    %v292 = vstv %s291
    %v293 = vmul.f32 %v292, %v286
    %v294 = vadd.f32 %v280, %v293
    %s295 = sld [smem:[#allocation7 + $0x46]]
    %v296 = vstv %s295
    %v297 = vmul.f32 %v296, %v286
    %v298 = vadd.f32 %v284, %v297
    %s299 = scalar_lea.vmem [#allocation2], 65
    %v300 = vld [vmem:[%s299] ss:$8 sm:$0xf]
    %s301 = sld [smem:[#allocation7 + $0x11]]
    %v302 = vstv %s301
    %v303 = vmul.f32 %v302, %v300
    %v304 = vadd.f32 %v290, %v303
    %s305 = sld [smem:[#allocation7 + $0x2c]]
    %v306 = vstv %s305
    %v307 = vmul.f32 %v306, %v300
    %v308 = vadd.f32 %v294, %v307
    %s309 = sld [smem:[#allocation7 + $0x47]]
    %v310 = vstv %s309
    %v311 = vmul.f32 %v310, %v300
    %v312 = vadd.f32 %v298, %v311
    %s313 = scalar_lea.vmem [#allocation2], 66
    %v314 = vld [vmem:[%s313] ss:$8 sm:$0xf]
    %s315 = sld [smem:[#allocation7 + $0x12]]
    %v316 = vstv %s315
    %v317 = vmul.f32 %v316, %v314
    %v318 = vadd.f32 %v304, %v317
    %s319 = sld [smem:[#allocation7 + $0x2d]]
    %v320 = vstv %s319
    %v321 = vmul.f32 %v320, %v314
    %v322 = vadd.f32 %v308, %v321
    %s323 = sld [smem:[#allocation7 + $0x48]]
    %v324 = vstv %s323
    %v325 = vmul.f32 %v324, %v314
    %v326 = vadd.f32 %v312, %v325
    %s327 = scalar_lea.vmem [#allocation2], 67
    %v328 = vld [vmem:[%s327] ss:$8 sm:$0xf]
    %s329 = sld [smem:[#allocation7 + $0x13]]
    %v330 = vstv %s329
    %v331 = vmul.f32 %v330, %v328
    %v332 = vadd.f32 %v318, %v331
    %s333 = sld [smem:[#allocation7 + $0x2e]]
    %v334 = vstv %s333
    %v335 = vmul.f32 %v334, %v328
    %v336 = vadd.f32 %v322, %v335
    %s337 = sld [smem:[#allocation7 + $0x49]]
    %v338 = vstv %s337
    %v339 = vmul.f32 %v338, %v328
    %v340 = vadd.f32 %v326, %v339
    %s341 = scalar_lea.vmem [#allocation2], 68
    %v342 = vld [vmem:[%s341] ss:$8 sm:$0xf]
    %s343 = sld [smem:[#allocation7 + $0x14]]
    %v344 = vstv %s343
    %v345 = vmul.f32 %v344, %v342
    %v346 = vadd.f32 %v332, %v345
    %s347 = sld [smem:[#allocation7 + $0x2f]]
    %v348 = vstv %s347
    %v349 = vmul.f32 %v348, %v342
    %v350 = vadd.f32 %v336, %v349
    %s351 = sld [smem:[#allocation7 + $0x4a]]
    %v352 = vstv %s351
    %v353 = vmul.f32 %v352, %v342
    %v354 = vadd.f32 %v340, %v353
    %s355 = scalar_lea.vmem [#allocation2], 69
    %v356 = vld [vmem:[%s355] ss:$8 sm:$0xf]
    %s357 = sld [smem:[#allocation7 + $0x15]]
    %v358 = vstv %s357
    %v359 = vmul.f32 %v358, %v356
    %v360 = vadd.f32 %v346, %v359
    %s361 = sld [smem:[#allocation7 + $0x30]]
    %v362 = vstv %s361
    %v363 = vmul.f32 %v362, %v356
    %v364 = vadd.f32 %v350, %v363
    %s365 = sld [smem:[#allocation7 + $0x4b]]
    %v366 = vstv %s365
    %v367 = vmul.f32 %v366, %v356
    %v368 = vadd.f32 %v354, %v367
    %s369 = scalar_lea.vmem [#allocation2], 70
    %v370 = vld [vmem:[%s369] ss:$8 sm:$0xf]
    %s371 = sld [smem:[#allocation7 + $0x16]]
    %v372 = vstv %s371
    %v373 = vmul.f32 %v372, %v370
    %v374 = vadd.f32 %v360, %v373
    %s375 = sld [smem:[#allocation7 + $0x31]]
    %v376 = vstv %s375
    %v377 = vmul.f32 %v376, %v370
    %v378 = vadd.f32 %v364, %v377
    %s379 = sld [smem:[#allocation7 + $0x4c]]
    %v380 = vstv %s379
    %v381 = vmul.f32 %v380, %v370
    %v382 = vadd.f32 %v368, %v381
    %s383 = scalar_lea.vmem [#allocation2], 71
    %v384 = vld [vmem:[%s383] ss:$8 sm:$0xf]
    %s385 = sld [smem:[#allocation7 + $0x17]]
    %v386 = vstv %s385
    %v387 = vmul.f32 %v386, %v384
    %v388 = vadd.f32 %v374, %v387
    %s389 = sld [smem:[#allocation7 + $0x32]]
    %v390 = vstv %s389
    %v391 = vmul.f32 %v390, %v384
    %v392 = vadd.f32 %v378, %v391
    %s393 = sld [smem:[#allocation7 + $0x4d]]
    %v394 = vstv %s393
    %v395 = vmul.f32 %v394, %v384
    %v396 = vadd.f32 %v382, %v395
    %s397 = scalar_lea.vmem [#allocation2], 96
    %v398 = vld [vmem:[%s397] ss:$8 sm:$0xf]
    %s399 = sld [smem:[#allocation7 + $0x18]]
    %v400 = vstv %s399
    %v401 = vmul.f32 %v400, %v398
    %v402 = vadd.f32 %v388, %v401
    %s403 = sld [smem:[#allocation7 + $0x33]]
    %v404 = vstv %s403
    %v405 = vmul.f32 %v404, %v398
    %v406 = vadd.f32 %v392, %v405
    %s407 = sld [smem:[#allocation7 + $0x4e]]
    %v408 = vstv %s407
    %v409 = vmul.f32 %v408, %v398
    %v410 = vadd.f32 %v396, %v409
    %s411 = scalar_lea.vmem [#allocation2], 97
    %v412 = vld [vmem:[%s411] ss:$8 sm:$0xf]
    %s413 = sld [smem:[#allocation7 + $0x19]]
    %v414 = vstv %s413
    %v415 = vmul.f32 %v414, %v412
    %v416 = vadd.f32 %v402, %v415
    %s417 = sld [smem:[#allocation7 + $0x34]]
    %v418 = vstv %s417
    %v419 = vmul.f32 %v418, %v412
    %v420 = vadd.f32 %v406, %v419
    %s421 = sld [smem:[#allocation7 + $0x4f]]
    %v422 = vstv %s421
    %v423 = vmul.f32 %v422, %v412
    %v424 = vadd.f32 %v410, %v423
    %s425 = scalar_lea.vmem [#allocation2], 98
    %v426 = vld [vmem:[%s425] ss:$8 sm:$0xf]
    %s427 = sld [smem:[#allocation7 + $0x1a]]
    %v428 = vstv %s427
    %v429 = vmul.f32 %v428, %v426
    %v430 = vadd.f32 %v416, %v429
    %s431 = sld [smem:[#allocation7 + $0x35]]
    %v432 = vstv %s431
    %v433 = vmul.f32 %v432, %v426
    %v434 = vadd.f32 %v420, %v433
    %s435 = sld [smem:[#allocation7 + $0x50]]
    %v436 = vstv %s435
    %v437 = vmul.f32 %v436, %v426
    %v438 = vadd.f32 %v424, %v437
    %v439 = vlaneseq
    %vm440 = vcmp.ge.s32.totalorder %v439, 0
    %vm441 = vcmp.lt.s32.totalorder %v439, 512
    %vm442 = vmand %vm440, %vm441
    %443 = vst.msk [vmem:[#allocation9] ss:$4 sm:$0xf] %vm442, %v430
    %s444 = scalar_lea.vmem [#allocation9], 1
    %445 = vst.msk [vmem:[%s444] ss:$4 sm:$0xf] %vm442, %v434
    %s446 = scalar_lea.vmem [#allocation9], 2
    %447 = vst.msk [vmem:[%s446] ss:$4 sm:$0xf] %vm442, %v438
    // Predicated region
    $region26: #{tpu_custom_call.1} parent=1 // pred_check
      _
    $region27: #{tpu_custom_call.1} parent=1 // pred_check_branch
      %449 = sbr.rel (0) target = $region29
    $region28: #{tpu_custom_call.1} parent=1 // pred_region
      %451 = vsyncadd [#allocation4], 0
      %s453 = sshll.u32 [#allocation9], 4
      %s454 = int_to_ptr.vmem [resolvable:$true] %s453
      %s455 = sshll.u32 %s3, 4
      %s456 = int_to_ptr.hbm [resolvable:$true] %s455
      %458 = dma.vmem_to_hbm [thread:$0]  %s454, 256, %s456, [#allocation4]
    $region29: #{tpu_custom_call.1} parent=1 // pred_fallthru
      _
    // Predicated region
    $region30: #{tpu_custom_call.1} parent=1 // pred_check
      _
    $region31: #{tpu_custom_call.1} parent=1 // pred_check_branch
      %460 = sbr.rel (0) target = $region33
    $region32: #{tpu_custom_call.1} parent=1 // pred_region
      %462 = dma.done [#allocation4], 256
    $region33: #{tpu_custom_call.1} parent=1 // pred_fallthru
      _
    %463 = vsyncpa [#allocation3], 1
    %464 = vsyncpa [#allocation4], 1
    %465 = vsyncpa [#allocation5], 1
    %466 = vsyncpa [#allocation6], 1

</llo_original>
